<compile_context>
chip_gen: v5e
topology: v5e:2x2
jax: 0.10.0
libtpu: 0.0.40
codegen_flags: <defaults>
</compile_context>

<pallas_src>
import functools

import jax
import jax.numpy as jnp
from jax import lax
from jax.experimental import pallas as pl
from jax.experimental.pallas import tpu as pltpu
import numpy as np

_LANE = 128
_SUBLANE = 8


def _round_up(n, m):
    return ((n + m - 1) // m) * m


def local_model_kernel(
    x_ref,        # (T*Bp, D)  bf16, time-major, batch padded to sublane tile, flattened
    w_ih_ref,     # (D, H)     bf16, RNN input weights, pre-transposed
    w_hh_ref,     # (H, H)     bf16, RNN recurrent weights, pre-transposed
    b_rnn_ref,    # (1, H)     f32,  b_ih + b_hh
    w_heads_ref,  # (H, OWp)   bf16, fused heads [sig | p | mu | 0-pad], lane-padded
    b_heads_ref,  # (1, OWp)   f32
    out_ref,      # (Bp, OWp)  f32,  packed output [softplus | sigmoid | identity | pad]
    *, T, ow,
):
    Bp = out_ref.shape[0]
    H = w_hh_ref.shape[1]

    w_hh = w_hh_ref[...]                                    # (H, H) bf16, stays resident

    # Hoisted input projection: ONE (T*Bp, D) x (D, H) bf16 MXU matmul + one bias add.
    pre = (
        jnp.dot(x_ref[...], w_ih_ref[...], preferred_element_type=jnp.float32)
        + b_rnn_ref[...]
    )                                                       # (T*Bp, H) f32

    # Statically unrolled recurrence; h lives in vregs. Each `pre` slice starts at a
    # multiple of 8 sublanes (Bp % 8 == 0) so extraction is tile-aligned and free-ish.
    h = jnp.zeros((Bp, H), jnp.float32)
    for t in range(T):
        step = pre[t * Bp:(t + 1) * Bp, :]
        h = jnp.tanh(
            jnp.dot(h.astype(jnp.bfloat16), w_hh, preferred_element_type=jnp.float32)
            + step
        )

    # Fused heads: one (Bp,H)x(H,OWp) matmul + bias, per-lane activation selection,
    # single lane-dense (Bp, 128) store.
    logits = (
        jnp.dot(h.astype(jnp.bfloat16), w_heads_ref[...],
                preferred_element_type=jnp.float32)
        + b_heads_ref[...]
    )                                                       # (Bp, OWp) f32

    col = lax.broadcasted_iota(jnp.int32, logits.shape, 1)
    # softplus matching torch (beta=1, threshold=20)
    softplus = jnp.where(logits > 20.0, logits,
                         jnp.log1p(jnp.exp(jnp.minimum(logits, 20.0))))
    sigmoid = pl.reciprocal(1.0 + jnp.exp(-logits), approx=True)
    out_ref[...] = jnp.where(col < ow, softplus,
                             jnp.where(col < 2 * ow, sigmoid, logits))


def pack_params(params, output_window_size):
    """One-time parameter packing, hoisted out of the per-call path."""
    H = params["w_hh"].shape[0]
    OW = output_window_size
    OWp = _round_up(3 * OW, _LANE)

    # fc rows are interleaved [sig0, p0, mu0, sig1, ...]; de-interleave, pack the three
    # heads along the lane axis as [sig | p | mu] and zero-pad to a full 128-lane tile.
    w_fc, b_fc = params["w_fc"], params["b_fc"]
    w_heads = jnp.concatenate([w_fc[0::3].T, w_fc[1::3].T, w_fc[2::3].T], axis=1)
    b_heads = jnp.concatenate([b_fc[0::3], b_fc[1::3], b_fc[2::3]])
    w_heads = jnp.pad(w_heads, ((0, 0), (0, OWp - 3 * OW)))
    b_heads = jnp.pad(b_heads, (0, OWp - 3 * OW))

    return {
        "w_ih_t": params["w_ih"].T.astype(jnp.bfloat16),                      # (D, H)
        "w_hh_t": params["w_hh"].T.astype(jnp.bfloat16),                      # (H, H)
        "b_rnn": (params["b_ih"] + params["b_hh"]).reshape(1, H).astype(jnp.float32),
        "w_heads": w_heads.astype(jnp.bfloat16),                              # (H, OWp)
        "b_heads": b_heads.reshape(1, OWp).astype(jnp.float32),               # (1, OWp)
    }


@functools.partial(jax.jit, static_argnums=(2,))
def local_model_forward(x, packed, output_window_size):
    """x: (B, T, D) float32. Returns (sigma, p, local_mu), each (B, output_window_size)."""
    B, T, D = x.shape
    OW = output_window_size
    OWp = packed["b_heads"].shape[1]
    Bp = _round_up(max(B, _SUBLANE), _SUBLANE)

    # time-major, batch padded to a sublane tile, flattened: the in-kernel input
    # projection is one matmul and every per-step slice is tile-aligned.
    x_tm = jnp.transpose(x, (1, 0, 2))                       # (T, B, D)
    x_tm = jnp.pad(x_tm, ((0, 0), (0, Bp - B), (0, 0)))      # (T, Bp, D)
    x_tm = x_tm.reshape(T * Bp, D).astype(jnp.bfloat16)

    vmem = pl.BlockSpec(memory_space=pltpu.MemorySpace.VMEM)
    kernel = functools.partial(local_model_kernel, T=T, ow=OW)
    packed_out = pl.pallas_call(
        kernel,
        out_shape=jax.ShapeDtypeStruct((Bp, OWp), jnp.float32),
        in_specs=[vmem] * 6,
        out_specs=vmem,
    )(x_tm, packed["w_ih_t"], packed["w_hh_t"], packed["b_rnn"],
      packed["w_heads"], packed["b_heads"])

    sigma = packed_out[:B, :OW]
    p = packed_out[:B, OW:2 * OW]
    mu = packed_out[:B, 2 * OW:3 * OW]
    return sigma, p, mu


def init_params(key, d_plus_c, hidden_size, output_window_size):
    """Deterministic init mimicking PyTorch's uniform(-1/sqrt(H), 1/sqrt(H))."""
    ks = jax.random.split(key, 6)
    s = 1.0 / np.sqrt(hidden_size)
    OW3 = 3 * output_window_size
    return {
        "w_ih": jax.random.uniform(ks[0], (hidden_size, d_plus_c), jnp.float32, -s, s),
        "w_hh": jax.random.uniform(ks[1], (hidden_size, hidden_size), jnp.float32, -s, s),
        "b_ih": jax.random.uniform(ks[2], (hidden_size,), jnp.float32, -s, s),
        "b_hh": jax.random.uniform(ks[3], (hidden_size,), jnp.float32, -s, s),
        "w_fc": jax.random.uniform(ks[4], (OW3, hidden_size), jnp.float32, -s, s),
        "b_fc": jax.random.uniform(ks[5], (OW3,), jnp.float32, -s, s),
    }


def reference_forward_f32(x, params, output_window_size):
    """Pure-JAX f32 reference matching torch semantics."""
    B, T, D = x.shape
    H = params["w_hh"].shape[0]
    h = jnp.zeros((B, H), jnp.float32)
    for t in range(T):
        h = jnp.tanh(
            x[:, t, :] @ params["w_ih"].T + params["b_ih"]
            + h @ params["w_hh"].T + params["b_hh"]
        )
    out = h @ params["w_fc"].T + params["b_fc"]
    out = out.reshape(-1, output_window_size, 3)
    return jax.nn.softplus(out[:, :, 0]), jax.nn.sigmoid(out[:, :, 1]), out[:, :, 2]


def reference_forward_bf16(x, packed, output_window_size):
    """Pure-JAX reference with the same bf16-operand / f32-accum matmuls as the kernel."""
    B, T, D = x.shape
    OW = output_window_size
    H = packed["w_hh_t"].shape[0]
    xb = x.astype(jnp.bfloat16)
    h = jnp.zeros((B, H), jnp.float32)
    for t in range(T):
        pre = (jnp.dot(xb[:, t, :], packed["w_ih_t"],
                       preferred_element_type=jnp.float32) + packed["b_rnn"])
        h = jnp.tanh(jnp.dot(h.astype(jnp.bfloat16), packed["w_hh_t"],
                             preferred_element_type=jnp.float32) + pre)
    logits = (jnp.dot(h.astype(jnp.bfloat16), packed["w_heads"],
                      preferred_element_type=jnp.float32) + packed["b_heads"])
    sigma = jax.nn.softplus(logits[:, :OW])
    p = jax.nn.sigmoid(logits[:, OW:2 * OW])
    mu = logits[:, 2 * OW:3 * OW]
    return sigma, p, mu


if __name__ == "__main__":
    B, T, D_plus_C, hidden, OW = 2, 8, 4, 32, 24

    key = jax.random.PRNGKey(0)
    k_params, k_x = jax.random.split(key)
    params = init_params(k_params, D_plus_C, hidden, OW)
    packed_params = pack_params(params, OW)
    x = jax.random.normal(k_x, (B, T, D_plus_C), jnp.float32)

    sigma, p, mu = local_model_forward(x, packed_params, OW)
    jax.block_until_ready((sigma, p, mu))

    # Tight check vs a reference using identical bf16-operand matmuls (kernel logic).
    s_b, p_b, m_b = reference_forward_bf16(x, packed_params, OW)
    assert np.allclose(np.asarray(sigma), np.asarray(s_b), rtol=1e-2, atol=1e-2)
    assert np.allclose(np.asarray(p), np.asarray(p_b), rtol=1e-2, atol=1e-2)
    assert np.allclose(np.asarray(mu), np.asarray(m_b), rtol=1e-2, atol=1e-2)

    # Looser check vs the full-f32 torch-semantics reference (bf16 MXU operands drift
    # slightly through the T-step tanh recurrence; tolerance widened accordingly).
    s_f, p_f, m_f = reference_forward_f32(x, params, OW)
    assert np.allclose(np.asarray(sigma), np.asarray(s_f), rtol=5e-2, atol=5e-2)
    assert np.allclose(np.asarray(p), np.asarray(p_f), rtol=5e-2, atol=5e-2)
    assert np.allclose(np.asarray(mu), np.asarray(m_f), rtol=5e-2, atol=5e-2)

    print("KERNEL_OK")
</pallas_src>

<mosaic_0001>
module attributes {stable_mosaic.version = 11 : i64} {
  func.func @local_model_kernel(%arg0: memref<64x4xbf16, #tpu.memory_space<vmem>>, %arg1: memref<4x32xbf16, #tpu.memory_space<vmem>>, %arg2: memref<32x32xbf16, #tpu.memory_space<vmem>>, %arg3: memref<1x32xf32, #tpu.memory_space<vmem>>, %arg4: memref<32x128xbf16, #tpu.memory_space<vmem>>, %arg5: memref<1x128xf32, #tpu.memory_space<vmem>>, %arg6: memref<8x128xf32, #tpu.memory_space<vmem>>) attributes {dimension_semantics = [], scalar_prefetch = 0 : i64, scratch_operands = 0 : i64, tpu.core_type = #tpu.core_type<tc>} {
    %c0 = arith.constant 0 : index
    %c0_0 = arith.constant 0 : index
    %0 = vector.load %arg2[%c0, %c0_0] : memref<32x32xbf16, #tpu.memory_space<vmem>>, vector<32x32xbf16>
    %c0_1 = arith.constant 0 : index
    %c0_2 = arith.constant 0 : index
    %1 = vector.load %arg0[%c0_1, %c0_2] : memref<64x4xbf16, #tpu.memory_space<vmem>>, vector<64x4xbf16>
    %c0_3 = arith.constant 0 : index
    %c0_4 = arith.constant 0 : index
    %2 = vector.load %arg1[%c0_3, %c0_4] : memref<4x32xbf16, #tpu.memory_space<vmem>>, vector<4x32xbf16>
    %cst = arith.constant dense<0.000000e+00> : vector<64x32xf32>
    %3 = tpu.matmul %1, %2, %cst {dimension_numbers = #tpu.dot_dimension_numbers<[1], [0], [0], [1], [0, 0, 1, 1], [], []>} : vector<64x4xbf16>, vector<4x32xbf16>, vector<64x32xf32> -> vector<64x32xf32>
    %c0_5 = arith.constant 0 : index
    %c0_6 = arith.constant 0 : index
    %4 = vector.load %arg3[%c0_5, %c0_6] : memref<1x32xf32, #tpu.memory_space<vmem>>, vector<1x32xf32>
    %5 = vector.broadcast %4 : vector<1x32xf32> to vector<64x32xf32>
    %6 = arith.addf %3, %5 : vector<64x32xf32>
    %cst_7 = arith.constant 0.000000e+00 : f32
    %7 = vector.broadcast %cst_7 : f32 to vector<8x32xf32>
    %8 = vector.extract_strided_slice %6 {offsets = [0, 0], sizes = [8, 32], strides = [1, 1]} : vector<64x32xf32> to vector<8x32xf32>
    %9 = arith.truncf %7 : vector<8x32xf32> to vector<8x32xbf16>
    %cst_8 = arith.constant dense<0.000000e+00> : vector<8x32xf32>
    %10 = tpu.matmul %9, %0, %cst_8 {dimension_numbers = #tpu.dot_dimension_numbers<[1], [0], [0], [1], [0, 0, 1, 1], [], []>} : vector<8x32xbf16>, vector<32x32xbf16>, vector<8x32xf32> -> vector<8x32xf32>
    %11 = arith.addf %10, %8 : vector<8x32xf32>
    %12 = math.tanh %11 : vector<8x32xf32>
    %13 = vector.extract_strided_slice %6 {offsets = [8, 0], sizes = [8, 32], strides = [1, 1]} : vector<64x32xf32> to vector<8x32xf32>
    %14 = arith.truncf %12 : vector<8x32xf32> to vector<8x32xbf16>
    %cst_9 = arith.constant dense<0.000000e+00> : vector<8x32xf32>
    %15 = tpu.matmul %14, %0, %cst_9 {dimension_numbers = #tpu.dot_dimension_numbers<[1], [0], [0], [1], [0, 0, 1, 1], [], []>} : vector<8x32xbf16>, vector<32x32xbf16>, vector<8x32xf32> -> vector<8x32xf32>
    %16 = arith.addf %15, %13 : vector<8x32xf32>
    %17 = math.tanh %16 : vector<8x32xf32>
    %18 = vector.extract_strided_slice %6 {offsets = [16, 0], sizes = [8, 32], strides = [1, 1]} : vector<64x32xf32> to vector<8x32xf32>
    %19 = arith.truncf %17 : vector<8x32xf32> to vector<8x32xbf16>
    %cst_10 = arith.constant dense<0.000000e+00> : vector<8x32xf32>
    %20 = tpu.matmul %19, %0, %cst_10 {dimension_numbers = #tpu.dot_dimension_numbers<[1], [0], [0], [1], [0, 0, 1, 1], [], []>} : vector<8x32xbf16>, vector<32x32xbf16>, vector<8x32xf32> -> vector<8x32xf32>
    %21 = arith.addf %20, %18 : vector<8x32xf32>
    %22 = math.tanh %21 : vector<8x32xf32>
    %23 = vector.extract_strided_slice %6 {offsets = [24, 0], sizes = [8, 32], strides = [1, 1]} : vector<64x32xf32> to vector<8x32xf32>
    %24 = arith.truncf %22 : vector<8x32xf32> to vector<8x32xbf16>
    %cst_11 = arith.constant dense<0.000000e+00> : vector<8x32xf32>
    %25 = tpu.matmul %24, %0, %cst_11 {dimension_numbers = #tpu.dot_dimension_numbers<[1], [0], [0], [1], [0, 0, 1, 1], [], []>} : vector<8x32xbf16>, vector<32x32xbf16>, vector<8x32xf32> -> vector<8x32xf32>
    %26 = arith.addf %25, %23 : vector<8x32xf32>
    %27 = math.tanh %26 : vector<8x32xf32>
    %28 = vector.extract_strided_slice %6 {offsets = [32, 0], sizes = [8, 32], strides = [1, 1]} : vector<64x32xf32> to vector<8x32xf32>
    %29 = arith.truncf %27 : vector<8x32xf32> to vector<8x32xbf16>
    %cst_12 = arith.constant dense<0.000000e+00> : vector<8x32xf32>
    %30 = tpu.matmul %29, %0, %cst_12 {dimension_numbers = #tpu.dot_dimension_numbers<[1], [0], [0], [1], [0, 0, 1, 1], [], []>} : vector<8x32xbf16>, vector<32x32xbf16>, vector<8x32xf32> -> vector<8x32xf32>
    %31 = arith.addf %30, %28 : vector<8x32xf32>
    %32 = math.tanh %31 : vector<8x32xf32>
    %33 = vector.extract_strided_slice %6 {offsets = [40, 0], sizes = [8, 32], strides = [1, 1]} : vector<64x32xf32> to vector<8x32xf32>
    %34 = arith.truncf %32 : vector<8x32xf32> to vector<8x32xbf16>
    %cst_13 = arith.constant dense<0.000000e+00> : vector<8x32xf32>
    %35 = tpu.matmul %34, %0, %cst_13 {dimension_numbers = #tpu.dot_dimension_numbers<[1], [0], [0], [1], [0, 0, 1, 1], [], []>} : vector<8x32xbf16>, vector<32x32xbf16>, vector<8x32xf32> -> vector<8x32xf32>
    %36 = arith.addf %35, %33 : vector<8x32xf32>
    %37 = math.tanh %36 : vector<8x32xf32>
    %38 = vector.extract_strided_slice %6 {offsets = [48, 0], sizes = [8, 32], strides = [1, 1]} : vector<64x32xf32> to vector<8x32xf32>
    %39 = arith.truncf %37 : vector<8x32xf32> to vector<8x32xbf16>
    %cst_14 = arith.constant dense<0.000000e+00> : vector<8x32xf32>
    %40 = tpu.matmul %39, %0, %cst_14 {dimension_numbers = #tpu.dot_dimension_numbers<[1], [0], [0], [1], [0, 0, 1, 1], [], []>} : vector<8x32xbf16>, vector<32x32xbf16>, vector<8x32xf32> -> vector<8x32xf32>
    %41 = arith.addf %40, %38 : vector<8x32xf32>
    %42 = math.tanh %41 : vector<8x32xf32>
    %43 = vector.extract_strided_slice %6 {offsets = [56, 0], sizes = [8, 32], strides = [1, 1]} : vector<64x32xf32> to vector<8x32xf32>
    %44 = arith.truncf %42 : vector<8x32xf32> to vector<8x32xbf16>
    %cst_15 = arith.constant dense<0.000000e+00> : vector<8x32xf32>
    %45 = tpu.matmul %44, %0, %cst_15 {dimension_numbers = #tpu.dot_dimension_numbers<[1], [0], [0], [1], [0, 0, 1, 1], [], []>} : vector<8x32xbf16>, vector<32x32xbf16>, vector<8x32xf32> -> vector<8x32xf32>
    %46 = arith.addf %45, %43 : vector<8x32xf32>
    %47 = math.tanh %46 : vector<8x32xf32>
    %48 = arith.truncf %47 : vector<8x32xf32> to vector<8x32xbf16>
    %c0_16 = arith.constant 0 : index
    %c0_17 = arith.constant 0 : index
    %49 = vector.load %arg4[%c0_16, %c0_17] : memref<32x128xbf16, #tpu.memory_space<vmem>>, vector<32x128xbf16>
    %cst_18 = arith.constant dense<0.000000e+00> : vector<8x128xf32>
    %50 = tpu.matmul %48, %49, %cst_18 {dimension_numbers = #tpu.dot_dimension_numbers<[1], [0], [0], [1], [0, 0, 1, 1], [], []>} : vector<8x32xbf16>, vector<32x128xbf16>, vector<8x128xf32> -> vector<8x128xf32>
    %c0_19 = arith.constant 0 : index
    %c0_20 = arith.constant 0 : index
    %51 = vector.load %arg5[%c0_19, %c0_20] : memref<1x128xf32, #tpu.memory_space<vmem>>, vector<1x128xf32>
    %52 = vector.broadcast %51 : vector<1x128xf32> to vector<8x128xf32>
    %53 = arith.addf %50, %52 : vector<8x128xf32>
    %54 = tpu.iota {dimensions = array<i32: 1>} : vector<8x128xi32>
    %cst_21 = arith.constant 2.000000e+01 : f32
    %55 = vector.broadcast %cst_21 : f32 to vector<8x128xf32>
    %56 = arith.cmpf ogt, %53, %55 : vector<8x128xf32>
    %cst_22 = arith.constant 2.000000e+01 : f32
    %57 = vector.broadcast %cst_22 : f32 to vector<8x128xf32>
    %58 = arith.minimumf %53, %57 : vector<8x128xf32>
    %59 = math.exp %58 : vector<8x128xf32>
    %60 = math.log1p %59 : vector<8x128xf32>
    %61 = arith.select %56, %53, %60 : vector<8x128xi1>, vector<8x128xf32>
    %cst_23 = arith.constant 0.000000e+00 : f32
    %62 = vector.broadcast %cst_23 : f32 to vector<8x128xf32>
    %63 = arith.subf %62, %53 : vector<8x128xf32>
    %64 = math.exp %63 : vector<8x128xf32>
    %cst_24 = arith.constant 1.000000e+00 : f32
    %65 = vector.broadcast %cst_24 : f32 to vector<8x128xf32>
    %66 = arith.addf %65, %64 : vector<8x128xf32>
    %67 = tpu.reciprocal %66 {approx = true} : vector<8x128xf32> -> vector<8x128xf32>
    %c24_i32 = arith.constant 24 : i32
    %68 = vector.broadcast %c24_i32 : i32 to vector<8x128xi32>
    %69 = arith.cmpi slt, %54, %68 : vector<8x128xi32>
    %c48_i32 = arith.constant 48 : i32
    %70 = vector.broadcast %c48_i32 : i32 to vector<8x128xi32>
    %71 = arith.cmpi slt, %54, %70 : vector<8x128xi32>
    %72 = arith.select %71, %67, %53 : vector<8x128xi1>, vector<8x128xf32>
    %73 = arith.select %69, %61, %72 : vector<8x128xi1>, vector<8x128xf32>
    %c0_25 = arith.constant 0 : index
    %c0_26 = arith.constant 0 : index
    %74 = vector.load %arg6[%c0_25, %c0_26] : memref<8x128xf32, #tpu.memory_space<vmem>>, vector<8x128xf32>
    tpu.vector_store %arg6[%c0_25, %c0_26], %73 {strides = array<i32>} : memref<8x128xf32, #tpu.memory_space<vmem>>, vector<8x128xf32>,
    return
  }
}

</mosaic_0001>

<llo_original>
// kernel: local_model_forward.1
$region0: #{local_model_forward.1}
  #allocation0 [shape = 'u32[]', space=smem, size = 0x4, offset = 0x4, fixed_abs, tag = 'smem constant byte address 0x4 - core index']
  #allocation1 [shape = 'u32[72,128]{1,0:T(1,128)}', space=vmem, size = 0x9000, scoped, tag = 'internal scratch']
  %s0 = inlined_call_operand.vmem [shape: bf16[64,4], index: 0, kind: input, shape index: {}]
  %s1 = inlined_call_operand.vmem [shape: bf16[4,32], index: 1, kind: input, shape index: {}]
  %s2 = inlined_call_operand.vmem [shape: bf16[32,32], index: 2, kind: input, shape index: {}]
  %s3 = inlined_call_operand.vmem [shape: f32[1,32], index: 3, kind: input, shape index: {}]
  %s4 = inlined_call_operand.vmem [shape: bf16[32,128], index: 4, kind: input, shape index: {}]
  %s5 = inlined_call_operand.vmem [shape: f32[1,128], index: 5, kind: input, shape index: {}]
  %s6 = inlined_call_operand.vmem [shape: f32[8,128], index: 6, kind: output, shape index: {}]
  %s7 = sld [smem:[#allocation0]]
  $region34: #{local_model_forward.1} parent=0
    _
  %s9 = ssub.s32 1, %s7
  %s10 = scalar_select 0, %s9, %s7
  // Predicated region
  $region2: #{local_model_forward.1} parent=0 // pred_check
    _
  $region3: #{local_model_forward.1} parent=0 // pred_check_branch
    %12 = sbr.rel (0) target = $region5
  $region4: #{local_model_forward.1} parent=0 // pred_region
    _
  $region5: #{local_model_forward.1} parent=0 // pred_fallthru
    _
  // Predicated region
  $region6: #{local_model_forward.1} parent=0 // pred_check
    _
  $region7: #{local_model_forward.1} parent=0 // pred_check_branch
    %14 = sbr.rel (0) target = $region9
  $region8: #{local_model_forward.1} parent=0 // pred_region
    _
  $region9: #{local_model_forward.1} parent=0 // pred_fallthru
    _
  // Predicated region
  $region10: #{local_model_forward.1} parent=0 // pred_check
    _
  $region11: #{local_model_forward.1} parent=0 // pred_check_branch
    %16 = sbr.rel (0) target = $region13
  $region12: #{local_model_forward.1} parent=0 // pred_region
    _
  $region13: #{local_model_forward.1} parent=0 // pred_fallthru
    _
  // Predicated region
  $region14: #{local_model_forward.1} parent=0 // pred_check
    _
  $region15: #{local_model_forward.1} parent=0 // pred_check_branch
    %18 = sbr.rel (0) target = $region17
  $region16: #{local_model_forward.1} parent=0 // pred_region
    _
  $region17: #{local_model_forward.1} parent=0 // pred_fallthru
    _
  // Predicated region
  $region18: #{local_model_forward.1} parent=0 // pred_check
    _
  $region19: #{local_model_forward.1} parent=0 // pred_check_branch
    %20 = sbr.rel (0) target = $region21
  $region20: #{local_model_forward.1} parent=0 // pred_region
    _
  $region21: #{local_model_forward.1} parent=0 // pred_fallthru
    _
  // Predicated region
  $region22: #{local_model_forward.1} parent=0 // pred_check
    _
  $region23: #{local_model_forward.1} parent=0 // pred_check_branch
    %22 = sbr.rel (0) target = $region25
  $region24: #{local_model_forward.1} parent=0 // pred_region
    _
  $region25: #{local_model_forward.1} parent=0 // pred_fallthru
    _
  %v24 = vld [vmem:[%s2] sm:$0xf]
  %v25 = vld [vmem:[%s2 + $0x4] sm:$0xf]
  %v26 = vld [vmem:[%s2 + $0x8] sm:$0xf]
  %v27 = vld [vmem:[%s2 + $0xc] sm:$0xf]
  %v28 = vld [vmem:[%s0] sm:$0xf]
  %v29 = vld [vmem:[%s0 + $0x4] sm:$0xf]
  %v30 = vld [vmem:[%s0 + $0x8] sm:$0xf]
  %v31 = vld [vmem:[%s0 + $0xc] sm:$0xf]
  %v32 = vld [vmem:[%s0 + $0x10] sm:$0xf]
  %v33 = vld [vmem:[%s0 + $0x14] sm:$0xf]
  %v34 = vld [vmem:[%s0 + $0x18] sm:$0xf]
  %v35 = vld [vmem:[%s0 + $0x1c] sm:$0xf]
  %v36 = vld [vmem:[%s1] sm:$0x3]
  %v37 = vld [vmem:[%s3] sm:$0x1]
  %v39 = vperm.slane %v37, 0
  %v49 = vunpack.c.l.b16 %v28
  %v50 = vunpack.c.l.b16 %v29
  %v51 = vunpack.c.l.b16 %v30
  %v52 = vunpack.c.l.b16 %v31
  %v53 = vunpack.c.l.b16 %v32
  %v54 = vunpack.c.l.b16 %v33
  %v55 = vunpack.c.l.b16 %v34
  %v56 = vunpack.c.l.b16 %v35
  %v57 = vpack.c.b16 %v50, %v49
  %v58 = vpack.c.b16 %v52, %v51
  %v59 = vpack.c.b16 %v54, %v53
  %v60 = vpack.c.b16 %v56, %v55
  %vm61 = vcmask 31744
  %v63 = vsel %vm61, %v57, 0
  %v66 = vsel %vm61, %v58, 0
  %v69 = vsel %vm61, %v59, 0
  %v72 = vsel %vm61, %v60, 0
  %vm74 = vcmask 1041408
  %v76 = vsel %vm74, %v36, 0
  %78 = vmatpush.bf16.msra.mxu0 0
  %79 = vmatpush.bf16.msra.mxu0 0
  %80 = vmatpush.bf16.msra.mxu0 0
  %81 = vmatpush.bf16.msra.mxu0 0
  %82 = vmatpush.bf16.msra.mxu0 0
  %83 = vmatpush.bf16.msra.mxu0 0
  %84 = vmatpush.bf16.msra.mxu0 0
  %85 = vmatpush.bf16.msra.mxu0 %v76
  %86 = vmatmul.bf16.gmra.mxu0 %v63
  %v87 = vpop.f32.mrf.mxu0
  %v88 = vadd.f32 %v39, %v87
  %v89 = vpop.f32.mrf.mxu0
  %v90 = vadd.f32 %v39, %v89
  %91 = vmatmul.bf16.gmra.mxu0 %v66
  %v92 = vpop.f32.mrf.mxu0
  %v93 = vadd.f32 %v39, %v92
  %v94 = vpop.f32.mrf.mxu0
  %v95 = vadd.f32 %v39, %v94
  %96 = vmatmul.bf16.gmra.mxu0 %v69
  %v97 = vpop.f32.mrf.mxu0
  %v98 = vadd.f32 %v39, %v97
  %v99 = vpop.f32.mrf.mxu0
  %v100 = vadd.f32 %v39, %v99
  %101 = vmatmul.bf16.gmra.mxu0 %v72
  %v102 = vpop.f32.mrf.mxu0
  %v103 = vadd.f32 %v39, %v102
  %v104 = vpop.f32.mrf.mxu0
  %v105 = vadd.f32 %v39, %v104
  %106 = vdwg.mxu0
  %v111 = vunpack.c.l.b16 %v24
  %v112 = vunpack.c.l.b16 %v25
  %v113 = vunpack.c.l.b16 %v26
  %v114 = vunpack.c.l.b16 %v27
  %v115 = vpack.c.b16 %v112, %v111
  %v116 = vpack.c.b16 %v114, %v113
  %vm119 = vcmask 261120
  %v121 = vsel %vm119, 0, 0
  %123 = vmatpush.bf16.msra.mxu0 0
  %124 = vmatpush.bf16.msra.mxu0 0
  %125 = vmatpush.bf16.msra.mxu0 0
  %126 = vmatpush.bf16.msra.mxu0 0
  %127 = vmatpush.bf16.msra.mxu0 0
  %128 = vmatpush.bf16.msra.mxu0 0
  %129 = vmatpush.bf16.msra.mxu0 %v116
  %130 = vmatpush.bf16.msra.mxu0 %v115
  %131 = vmatmul.bf16.gmra.mxu0 %v121
  %v132 = vpop.f32.mrf.mxu0
  %v133 = vadd.f32 %v88, %v132
  %v134 = vpop.f32.mrf.mxu0
  %135 = vdwg.mxu0
  %v136 = vtanh.pop %v133
  %v137 = vpack.c.bf16 %v136, %v136
  %v139 = vsel %vm119, %v137, 0
  %141 = vmatpush.bf16.msra.mxu0 0
  %142 = vmatpush.bf16.msra.mxu0 0
  %143 = vmatpush.bf16.msra.mxu0 0
  %144 = vmatpush.bf16.msra.mxu0 0
  %145 = vmatpush.bf16.msra.mxu0 0
  %146 = vmatpush.bf16.msra.mxu0 0
  %147 = vmatpush.bf16.msra.mxu0 %v116
  %148 = vmatpush.bf16.msra.mxu0 %v115
  %149 = vmatmul.bf16.gmra.mxu0 %v139
  %v150 = vpop.f32.mrf.mxu0
  %v151 = vadd.f32 %v90, %v150
  %v152 = vpop.f32.mrf.mxu0
  %153 = vdwg.mxu0
  %v154 = vtanh.pop %v151
  %v155 = vpack.c.bf16 %v154, %v154
  %v157 = vsel %vm119, %v155, 0
  %159 = vmatpush.bf16.msra.mxu0 0
  %160 = vmatpush.bf16.msra.mxu0 0
  %161 = vmatpush.bf16.msra.mxu0 0
  %162 = vmatpush.bf16.msra.mxu0 0
  %163 = vmatpush.bf16.msra.mxu0 0
  %164 = vmatpush.bf16.msra.mxu0 0
  %165 = vmatpush.bf16.msra.mxu0 %v116
  %166 = vmatpush.bf16.msra.mxu0 %v115
  %167 = vmatmul.bf16.gmra.mxu0 %v157
  %v168 = vpop.f32.mrf.mxu0
  %v169 = vadd.f32 %v93, %v168
  %v170 = vpop.f32.mrf.mxu0
  %171 = vdwg.mxu0
  %v172 = vtanh.pop %v169
  %v173 = vpack.c.bf16 %v172, %v172
  %v175 = vsel %vm119, %v173, 0
  %177 = vmatpush.bf16.msra.mxu0 0
  %178 = vmatpush.bf16.msra.mxu0 0
  %179 = vmatpush.bf16.msra.mxu0 0
  %180 = vmatpush.bf16.msra.mxu0 0
  %181 = vmatpush.bf16.msra.mxu0 0
  %182 = vmatpush.bf16.msra.mxu0 0
  %183 = vmatpush.bf16.msra.mxu0 %v116
  %184 = vmatpush.bf16.msra.mxu0 %v115
  %185 = vmatmul.bf16.gmra.mxu0 %v175
  %v186 = vpop.f32.mrf.mxu0
  %v187 = vadd.f32 %v95, %v186
  %v188 = vpop.f32.mrf.mxu0
  %189 = vdwg.mxu0
  %v190 = vtanh.pop %v187
  %v191 = vpack.c.bf16 %v190, %v190
  %v193 = vsel %vm119, %v191, 0
  %195 = vmatpush.bf16.msra.mxu0 0
  %196 = vmatpush.bf16.msra.mxu0 0
  %197 = vmatpush.bf16.msra.mxu0 0
  %198 = vmatpush.bf16.msra.mxu0 0
  %199 = vmatpush.bf16.msra.mxu0 0
  %200 = vmatpush.bf16.msra.mxu0 0
  %201 = vmatpush.bf16.msra.mxu0 %v116
  %202 = vmatpush.bf16.msra.mxu0 %v115
  %203 = vmatmul.bf16.gmra.mxu0 %v193
  %v204 = vpop.f32.mrf.mxu0
  %v205 = vadd.f32 %v98, %v204
  %v206 = vpop.f32.mrf.mxu0
  %207 = vdwg.mxu0
  %v208 = vtanh.pop %v205
  %v209 = vpack.c.bf16 %v208, %v208
  %v211 = vsel %vm119, %v209, 0
  %213 = vmatpush.bf16.msra.mxu0 0
  %214 = vmatpush.bf16.msra.mxu0 0
  %215 = vmatpush.bf16.msra.mxu0 0
  %216 = vmatpush.bf16.msra.mxu0 0
  %217 = vmatpush.bf16.msra.mxu0 0
  %218 = vmatpush.bf16.msra.mxu0 0
  %219 = vmatpush.bf16.msra.mxu0 %v116
  %220 = vmatpush.bf16.msra.mxu0 %v115
  %221 = vmatmul.bf16.gmra.mxu0 %v211
  %v222 = vpop.f32.mrf.mxu0
  %v223 = vadd.f32 %v100, %v222
  %v224 = vpop.f32.mrf.mxu0
  %225 = vdwg.mxu0
  %v226 = vtanh.pop %v223
  %v227 = vpack.c.bf16 %v226, %v226
  %v229 = vsel %vm119, %v227, 0
  %231 = vmatpush.bf16.msra.mxu0 0
  %232 = vmatpush.bf16.msra.mxu0 0
  %233 = vmatpush.bf16.msra.mxu0 0
  %234 = vmatpush.bf16.msra.mxu0 0
  %235 = vmatpush.bf16.msra.mxu0 0
  %236 = vmatpush.bf16.msra.mxu0 0
  %237 = vmatpush.bf16.msra.mxu0 %v116
  %238 = vmatpush.bf16.msra.mxu0 %v115
  %239 = vmatmul.bf16.gmra.mxu0 %v229
  %v240 = vpop.f32.mrf.mxu0
  %v241 = vadd.f32 %v103, %v240
  %v242 = vpop.f32.mrf.mxu0
  %243 = vdwg.mxu0
  %v244 = vtanh.pop %v241
  %v245 = vpack.c.bf16 %v244, %v244
  %v247 = vsel %vm119, %v245, 0
  %249 = vmatpush.bf16.msra.mxu0 0
  %250 = vmatpush.bf16.msra.mxu0 0
  %251 = vmatpush.bf16.msra.mxu0 0
  %252 = vmatpush.bf16.msra.mxu0 0
  %253 = vmatpush.bf16.msra.mxu0 0
  %254 = vmatpush.bf16.msra.mxu0 0
  %255 = vmatpush.bf16.msra.mxu0 %v116
  %256 = vmatpush.bf16.msra.mxu0 %v115
  %257 = vmatmul.bf16.gmra.mxu0 %v247
  %v258 = vpop.f32.mrf.mxu0
  %v259 = vadd.f32 %v105, %v258
  %v260 = vpop.f32.mrf.mxu0
  %261 = vdwg.mxu0
  %v262 = vtanh.pop %v259
  %v263 = vpack.c.bf16 %v262, %v262
  %v264 = vld [vmem:[%s4] sm:$0xf]
  %v265 = vld [vmem:[%s4 + $0x4] sm:$0xf]
  %v266 = vld [vmem:[%s4 + $0x8] sm:$0xf]
  %v267 = vld [vmem:[%s4 + $0xc] sm:$0xf]
  %v268 = vld [vmem:[%s5] sm:$0x1]
  %v270 = vperm.slane %v268, 0
  %v276 = vunpack.c.l.b16 %v264
  %v277 = vunpack.c.l.b16 %v265
  %v278 = vunpack.c.l.b16 %v266
  %v279 = vunpack.c.l.b16 %v267
  %v280 = vpack.c.b16 %v277, %v276
  %v281 = vpack.c.b16 %v279, %v278
  %v285 = vsel %vm119, %v263, 0
  %287 = vmatpush.bf16.msra.mxu0 0
  %288 = vmatpush.bf16.msra.mxu0 0
  %289 = vmatpush.bf16.msra.mxu0 0
  %290 = vmatpush.bf16.msra.mxu0 0
  %291 = vmatpush.bf16.msra.mxu0 0
  %292 = vmatpush.bf16.msra.mxu0 0
  %293 = vmatpush.bf16.msra.mxu0 %v281
  %294 = vmatpush.bf16.msra.mxu0 %v280
  %295 = vmatmul.bf16.gmra.mxu0 %v285
  %v296 = vpop.f32.mrf.mxu0
  %v297 = vadd.f32 %v270, %v296
  %v298 = vpop.f32.mrf.mxu0
  %299 = vdwg.mxu0
  %v300 = vlaneseq
  %v301 = vand.u32 %v300, 127
  %vm302 = vcmp.gt.f32.partialorder %v297, 20.0
  %v303 = vmin.f32 %v297, 20.0
  %v304 = vmul.f32 %v303, 1.442695
  %v305 = vpow.pop %v304
  %v306 = vadd.f32 %v305, 1.0
  %v307 = vlog2.pop %v306
  %v308 = vmul.f32 %v307, 0.6931472
  %v309 = vmul.f32 -0.5, %v305
  %v310 = vadd.f32 %v309, 1.0
  %v311 = vmul.f32 %v310, %v305
  %v312 = vand.u32 2147483647, %v305
  %vm313 = vcmp.lt.f32.partialorder %v312, 0.0004427343
  %v314 = vsel %vm313, %v311, %v308
  %v315 = vsel %vm302, %v297, %v314
  %v316 = vsub.f32 0.0, %v297
  %v317 = vmul.f32 %v316, 1.442695
  %v318 = vpow.pop %v317
  %v319 = vadd.f32 %v318, 1.0
  %v320 = vrcp.pop %v319
  %vm321 = vcmp.lt.s32.totalorder %v301, 24
  %vm322 = vcmp.lt.s32.totalorder %v301, 48
  %v323 = vsel %vm322, %v320, %v297
  %v324 = vsel %vm321, %v315, %v323
  %325 = vst [vmem:[%s6] sm:$0xff] %v324
  // Predicated region
  $region26: #{local_model_forward.1} parent=0 // pred_check
    _
  $region27: #{local_model_forward.1} parent=0 // pred_check_branch
    %327 = sbr.rel (0) target = $region29
  $region28: #{local_model_forward.1} parent=0 // pred_region
    _
  $region29: #{local_model_forward.1} parent=0 // pred_fallthru
    _
  // Predicated region
  $region30: #{local_model_forward.1} parent=0 // pred_check
    _
  $region31: #{local_model_forward.1} parent=0 // pred_check_branch
    %329 = sbr.rel (0) target = $region33
  $region32: #{local_model_forward.1} parent=0 // pred_region
    _
  $region33: #{local_model_forward.1} parent=0 // pred_fallthru
    _

</llo_original>
